<compile_context>
chip_gen: v5e
topology: v5e:2x2
jax: 0.10.0
libtpu: 0.0.40
codegen_flags: <defaults>
</compile_context>

<pallas_src>
import numpy as np
import jax
import jax.numpy as jnp
from jax.experimental import pallas as pl
from jax.experimental.pallas import tpu as pltpu

# ---------------- synthetic hparams (deterministic, in-script) ----------------
SAMPLE_RATE = 16000
REF_LEVEL_DB = 20.0
MIN_LEVEL_DB = -100.0

# Small config consistent with the module (scaled down from 1024/256/2048/80).
WIN_LENGTH = 64
HOP_LENGTH = 16
N_FFT = 128
N_MELS = 16
N_FREQ = N_FFT // 2 + 1                     # 65
PAD_FREQ = 128                              # N_FREQ zero-padded to a full lane tile
FRAME_SPAN = WIN_LENGTH + HOP_LENGTH        # 80: x-samples a frame touches once the
                                            # pre-emphasis FIR is folded into the basis
CHUNKS_PER_FRAME = FRAME_SPAN // HOP_LENGTH  # 5
LOOK_CHUNKS = 8                             # sublane-aligned cross-tile lookahead (>=4)
PREEMP_W0 = -0.97                           # Conv1d(1,1,2,bias=False).weight[0,0,0]
PREEMP_W1 = 1.0                             # Conv1d(1,1,2,bias=False).weight[0,0,1]

# Fused dB + normalize:  (20*log10(m+eps) - REF - MIN)/(-MIN)  ==  LOG_A*ln(m+eps) + LOG_B
LOG_A = 20.0 / np.log(10.0) / (-MIN_LEVEL_DB)
LOG_B = (-REF_LEVEL_DB - MIN_LEVEL_DB) / (-MIN_LEVEL_DB)

assert WIN_LENGTH % HOP_LENGTH == 0
assert LOOK_CHUNKS % 8 == 0 and LOOK_CHUNKS >= CHUNKS_PER_FRAME - 1


# ---------------- mel filterbank (Slaney-style, librosa.filters.mel default) ----------------
def _hz_to_mel(f):
    f = np.asarray(f, dtype=np.float64)
    f_sp = 200.0 / 3
    min_log_hz = 1000.0
    min_log_mel = min_log_hz / f_sp
    logstep = np.log(6.4) / 27.0
    mel = f / f_sp
    return np.where(f >= min_log_hz,
                    min_log_mel + np.log(np.maximum(f, 1e-10) / min_log_hz) / logstep,
                    mel)


def _mel_to_hz(m):
    m = np.asarray(m, dtype=np.float64)
    f_sp = 200.0 / 3
    min_log_hz = 1000.0
    min_log_mel = min_log_hz / f_sp
    logstep = np.log(6.4) / 27.0
    hz = f_sp * m
    return np.where(m >= min_log_mel,
                    min_log_hz * np.exp(logstep * (m - min_log_mel)),
                    hz)


def _build_mel_basis(sr, n_fft, n_mels):
    n_freq = n_fft // 2 + 1
    fftfreqs = np.linspace(0.0, sr / 2.0, n_freq)
    mel_f = _mel_to_hz(np.linspace(_hz_to_mel(0.0), _hz_to_mel(sr / 2.0), n_mels + 2))
    fdiff = np.diff(mel_f)
    ramps = mel_f[:, None] - fftfreqs[None, :]
    weights = np.zeros((n_mels, n_freq))
    for i in range(n_mels):
        lower = -ramps[i] / fdiff[i]
        upper = ramps[i + 2] / fdiff[i + 1]
        weights[i] = np.maximum(0.0, np.minimum(lower, upper))
    enorm = 2.0 / (mel_f[2:n_mels + 2] - mel_f[:n_mels])
    weights *= enorm[:, None]
    # torch code transposes: (n_freq, n_mels)
    return weights.T.astype(np.float32)


# ---------------- constant bases (deterministic "buffers") ----------------
_HANN_NP = 0.5 - 0.5 * np.cos(2.0 * np.pi * np.arange(WIN_LENGTH) / WIN_LENGTH)  # periodic hann
_n = np.arange(WIN_LENGTH, dtype=np.float64)[:, None]
_k = np.arange(N_FREQ, dtype=np.float64)[None, :]
_ang = 2.0 * np.pi * _n * _k / N_FFT

# Hann window folded into the DFT basis; [cos | -sin] packed side by side, each padded
# to 128 lanes so one bf16 MXU matmul yields real and imaginary parts together.
_BASE_NP = np.zeros((WIN_LENGTH, 2 * PAD_FREQ), dtype=np.float64)
_BASE_NP[:, :N_FREQ] = _HANN_NP[:, None] * np.cos(_ang)
_BASE_NP[:, PAD_FREQ:PAD_FREQ + N_FREQ] = _HANN_NP[:, None] * -np.sin(_ang)

# Pre-emphasis y[t] = x[t] - 0.97*x[t-1] folded in as well: with one zero chunk
# prepended to the audio, frame f is a linear function of the 80 samples
# xp[f*HOP .. f*HOP+79]; row m of the folded basis carries
#   W1 * BASE[m-HOP]   (current sample)   +   W0 * BASE[m-HOP+1]   (previous sample).
_B80_NP = np.zeros((FRAME_SPAN, 2 * PAD_FREQ), dtype=np.float64)
_B80_NP[HOP_LENGTH:HOP_LENGTH + WIN_LENGTH, :] += PREEMP_W1 * _BASE_NP
_B80_NP[HOP_LENGTH - 1:HOP_LENGTH - 1 + WIN_LENGTH, :] += PREEMP_W0 * _BASE_NP
_BASIS = jnp.asarray(_B80_NP, dtype=jnp.bfloat16)            # (80, 256) bf16 MXU operand

_MEL_NP = _build_mel_basis(SAMPLE_RATE, N_FFT, N_MELS)       # (N_FREQ, N_MELS) f32
_MELT_NP = np.zeros((N_MELS, PAD_FREQ), dtype=np.float32)
_MELT_NP[:, :N_FREQ] = _MEL_NP.T                             # transposed + lane-padded
_MELT = jnp.asarray(_MELT_NP)                                # (16, 128) f32


# ---------------- Pallas kernel ----------------
def _mel_kernel(sig_ref, look_ref, basis_ref, melt_ref, o_ref):
    """One (batch, frame-tile) step: FT frames -> (N_MELS, FT) normalized mel-dB.

    sig_ref  : (FT, HOP) f32   chunks j*FT .. j*FT+FT-1 of the zero-chunk-shifted signal
    look_ref : (8,  HOP) f32   chunks j*FT+FT .. j*FT+FT+7 (cross-tile lookahead)
    basis_ref: (80, 2*PAD_FREQ) bf16   pre-emphasis + hann + [cos | -sin] DFT, folded
    melt_ref : (N_MELS, PAD_FREQ) f32  transposed, lane-padded mel filterbank
    o_ref    : (N_MELS, FT) f32
    """
    ft = sig_ref.shape[0]
    xc = jnp.concatenate([sig_ref[...], look_ref[...]], axis=0)          # (FT+8, HOP) f32

    # Frame assembly: frame f is the concat of x-chunks f .. f+4 (80 samples); the
    # pre-emphasis / window / DFT linear algebra all lives in the folded basis.
    frames = jnp.concatenate(
        [xc[c:c + ft, :] for c in range(CHUNKS_PER_FRAME)], axis=1)      # (FT, 80) f32

    # Windowed, pre-emphasized DFT: one packed bf16 MXU pass, f32 accumulation;
    # re/im come out as lane-aligned 128-wide halves.
    ri = jnp.dot(frames.astype(jnp.bfloat16), basis_ref[...],
                 preferred_element_type=jnp.float32)                     # (FT, 256) f32
    re = ri[:, :PAD_FREQ]
    im = ri[:, PAD_FREQ:]
    spec = jnp.sqrt(re * re + im * im)                                   # (FT, 128) f32

    # Mel projection, produced directly in TRANSPOSED (N_MELS, FT) form by contracting
    # the frequency (lane) dim of both operands on the MXU ("A @ B^T").  This keeps the
    # dB/normalize math and the HBM store fully lane-dense (no 16-lane masked stores).
    melT = jax.lax.dot_general(melt_ref[...], spec,
                               dimension_numbers=(((1,), (1,)), ((), ())),
                               preferred_element_type=jnp.float32)       # (16, FT) f32

    # _amp_to_db + ref-level shift + _normalize fused into a single a*ln(x)+b.
    # Padded tail frames produce ln(1e-5)-based junk that the wrapper slices off.
    o_ref[...] = LOG_A * jnp.log(melT + 1e-5) + LOG_B


# ---------------- wrapper ----------------
def _round_up(v, m):
    return (v + m - 1) // m * m


def mel_spectrogram(x, tile_frames=2048):
    """x: (B, T) float32 audio -> (B, num_frames, N_MELS) float32."""
    x = x.astype(jnp.float32)
    B, T = x.shape
    # Conv1d(kernel=2, padding=1) output length is T+1; old torch.stft: no center pad.
    n_frames = 1 + (T + 1 - WIN_LENGTH) // HOP_LENGTH
    assert n_frames >= 1, "audio too short for one frame"

    # ft is the lane dim of every per-tile intermediate and of the output block, so it
    # must be a multiple of 128.
    ft = max(128, _round_up(min(int(tile_frames), n_frames), 128))
    n_tiles = -(-n_frames // ft)
    # v7x megacore: make sure there are >= 2 parallel grid points whenever possible so
    # both TensorCores get work (no-op on v5e/v6e).
    if B * n_tiles < 2 and n_frames > 128:
        ft = _round_up(-(-n_frames // 2), 128)
        n_tiles = -(-n_frames // ft)
    n_frames_pad = n_tiles * ft
    assert ft % LOOK_CHUNKS == 0             # lookahead index_map relies on this
    look_blk = ft // LOOK_CHUNKS

    n_chunks = n_frames_pad + LOOK_CHUNKS
    l_pad = n_chunks * HOP_LENGTH
    assert l_pad >= T + HOP_LENGTH

    # One leading zero chunk implements the Conv1d left pad AND gives every frame its
    # previous-sample context (folded into the basis); trailing zeros implement the
    # right pad / tile padding.
    xp = jnp.pad(x, ((0, 0), (HOP_LENGTH, l_pad - T - HOP_LENGTH)))
    xch = xp.reshape(B, n_chunks, HOP_LENGTH)                            # (B, n_chunks, HOP)

    out = pl.pallas_call(
        _mel_kernel,
        out_shape=jax.ShapeDtypeStruct((B, N_MELS, n_frames_pad), jnp.float32),
        grid=(B, n_tiles),
        in_specs=[
            # main chunks of this frame tile
            pl.BlockSpec((None, ft, HOP_LENGTH), lambda b, j: (b, j, 0)),
            # 8-chunk lookahead right after the tile (second view of the same array)
            pl.BlockSpec((None, LOOK_CHUNKS, HOP_LENGTH),
                         lambda b, j: (b, (j + 1) * look_blk, 0)),
            # resident constants (same block every step -> no re-DMA)
            pl.BlockSpec((FRAME_SPAN, 2 * PAD_FREQ), lambda b, j: (0, 0)),
            pl.BlockSpec((N_MELS, PAD_FREQ), lambda b, j: (0, 0)),
        ],
        out_specs=pl.BlockSpec((None, N_MELS, ft), lambda b, j: (b, 0, j)),
        compiler_params=pltpu.CompilerParams(
            dimension_semantics=("parallel", "parallel")),
    )(xch, xch, _BASIS, _MELT)

    # (B, N_MELS, F_pad) -> (B, F, N_MELS); padded tail frames are sliced off here
    # (intentional -- do not mask them in-kernel).
    return jnp.transpose(out[:, :, :n_frames], (0, 2, 1))


# ---------------- pure-numpy reference (for correctness check) ----------------
def _reference(x_np):
    B, T = x_np.shape
    x_pad = np.pad(x_np, ((0, 0), (1, 1)))
    y = PREEMP_W1 * x_pad[:, 1:] + PREEMP_W0 * x_pad[:, :-1]             # (B, T+1)
    n_frames = 1 + (T + 1 - WIN_LENGTH) // HOP_LENGTH
    idx = HOP_LENGTH * np.arange(n_frames)[:, None] + np.arange(WIN_LENGTH)[None, :]
    frames = y[:, idx] * _HANN_NP[None, None, :]
    spec = np.abs(np.fft.rfft(frames, n=N_FFT, axis=-1))
    mel = spec @ _MEL_NP.astype(np.float64)
    db = 20.0 * np.log10(mel + 1e-5) - REF_LEVEL_DB
    return (db - MIN_LEVEL_DB) / (-MIN_LEVEL_DB)


if __name__ == "__main__":
    key = jax.random.PRNGKey(0)
    B, T = 2, 2500
    x = jax.random.normal(key, (B, T), dtype=jnp.float32)

    # tile_frames=128 -> grid (B=2, 2 frame tiles): exercises the multi-tile path and
    # the cross-tile chunk lookahead with real (non-zero) data.
    out = jax.block_until_ready(mel_spectrogram(x, tile_frames=128))

    ref = _reference(np.asarray(x, dtype=np.float64))
    assert out.shape == ref.shape, (out.shape, ref.shape)
    # bf16 MXU operands on the spectral path (f32 accumulation, f32 mel projection)
    # => ~1e-3 typical error on the normalized-dB scale vs the float64 reference.
    assert np.allclose(np.asarray(out), ref, rtol=1e-2, atol=1e-2), "mismatch vs reference"

    print("KERNEL_OK")
</pallas_src>

<mosaic_0001>
module attributes {stable_mosaic.version = 11 : i64} {
  func.func @_mel_kernel(%arg0: i32, %arg1: i32, %arg2: memref<1x128x16xf32, #tpu.memory_space<vmem>>, %arg3: memref<1x8x16xf32, #tpu.memory_space<vmem>>, %arg4: memref<80x256xbf16, #tpu.memory_space<vmem>>, %arg5: memref<16x128xf32, #tpu.memory_space<vmem>>, %arg6: memref<1x16x128xf32, #tpu.memory_space<vmem>>) attributes {dimension_semantics = [#tpu.dimension_semantics<parallel>, #tpu.dimension_semantics<parallel>], iteration_bounds = array<i64: 2, 2>, scalar_prefetch = 0 : i64, scratch_operands = 0 : i64, tpu.core_type = #tpu.core_type<tc>, window_params = [{transform_indices = @transform_0, window_bounds = array<i64: 1, 128, 16>}, {transform_indices = @transform_1, window_bounds = array<i64: 1, 8, 16>}, {pipeline_mode = #tpu.pipeline_mode<synchronous>, transform_indices = @transform_2, window_bounds = array<i64: 80, 256>}, {pipeline_mode = #tpu.pipeline_mode<synchronous>, transform_indices = @transform_3, window_bounds = array<i64: 16, 128>}, {transform_indices = @transform_4, window_bounds = array<i64: 1, 16, 128>}]} {
    %c0 = arith.constant 0 : index
    %c0_0 = arith.constant 0 : index
    %c0_1 = arith.constant 0 : index
    %0 = vector.load %arg2[%c0, %c0_0, %c0_1] : memref<1x128x16xf32, #tpu.memory_space<vmem>>, vector<1x128x16xf32>
    %1 = vector.shape_cast %0 : vector<1x128x16xf32> to vector<128x16xf32>
    %c0_2 = arith.constant 0 : index
    %c0_3 = arith.constant 0 : index
    %c0_4 = arith.constant 0 : index
    %2 = vector.load %arg3[%c0_2, %c0_3, %c0_4] : memref<1x8x16xf32, #tpu.memory_space<vmem>>, vector<1x8x16xf32>
    %3 = vector.shape_cast %2 : vector<1x8x16xf32> to vector<8x16xf32>
    %4 = tpu.concatenate %1, %3 in 0 : vector<128x16xf32>, vector<8x16xf32> -> vector<136x16xf32>
    %5 = vector.extract_strided_slice %4 {offsets = [0, 0], sizes = [128, 16], strides = [1, 1]} : vector<136x16xf32> to vector<128x16xf32>
    %6 = vector.extract_strided_slice %4 {offsets = [1, 0], sizes = [128, 16], strides = [1, 1]} : vector<136x16xf32> to vector<128x16xf32>
    %7 = vector.extract_strided_slice %4 {offsets = [2, 0], sizes = [128, 16], strides = [1, 1]} : vector<136x16xf32> to vector<128x16xf32>
    %8 = vector.extract_strided_slice %4 {offsets = [3, 0], sizes = [128, 16], strides = [1, 1]} : vector<136x16xf32> to vector<128x16xf32>
    %9 = vector.extract_strided_slice %4 {offsets = [4, 0], sizes = [128, 16], strides = [1, 1]} : vector<136x16xf32> to vector<128x16xf32>
    %10 = tpu.concatenate %5, %6, %7, %8, %9 in 1 : vector<128x16xf32>, vector<128x16xf32>, vector<128x16xf32>, vector<128x16xf32>, vector<128x16xf32> -> vector<128x80xf32>
    %11 = arith.truncf %10 : vector<128x80xf32> to vector<128x80xbf16>
    %c0_5 = arith.constant 0 : index
    %c0_6 = arith.constant 0 : index
    %12 = vector.load %arg4[%c0_5, %c0_6] : memref<80x256xbf16, #tpu.memory_space<vmem>>, vector<80x256xbf16>
    %cst = arith.constant dense<0.000000e+00> : vector<128x256xf32>
    %13 = tpu.matmul %11, %12, %cst {dimension_numbers = #tpu.dot_dimension_numbers<[1], [0], [0], [1], [0, 0, 1, 1], [], []>} : vector<128x80xbf16>, vector<80x256xbf16>, vector<128x256xf32> -> vector<128x256xf32>
    %14 = vector.extract_strided_slice %13 {offsets = [0, 0], sizes = [128, 128], strides = [1, 1]} : vector<128x256xf32> to vector<128x128xf32>
    %15 = vector.extract_strided_slice %13 {offsets = [0, 128], sizes = [128, 128], strides = [1, 1]} : vector<128x256xf32> to vector<128x128xf32>
    %16 = arith.mulf %14, %14 : vector<128x128xf32>
    %17 = arith.mulf %15, %15 : vector<128x128xf32>
    %18 = arith.addf %16, %17 : vector<128x128xf32>
    %19 = math.sqrt %18 : vector<128x128xf32>
    %c0_7 = arith.constant 0 : index
    %c0_8 = arith.constant 0 : index
    %20 = vector.load %arg5[%c0_7, %c0_8] : memref<16x128xf32, #tpu.memory_space<vmem>>, vector<16x128xf32>
    %cst_9 = arith.constant dense<0.000000e+00> : vector<16x128xf32>
    %21 = tpu.matmul %20, %19, %cst_9 {dimension_numbers = #tpu.dot_dimension_numbers<[1], [1], [0], [0], [0, 0, 1, 0], [], []>} : vector<16x128xf32>, vector<128x128xf32>, vector<16x128xf32> -> vector<16x128xf32>
    %cst_10 = arith.constant 9.99999974E-6 : f32
    %22 = vector.broadcast %cst_10 : f32 to vector<16x128xf32>
    %23 = arith.addf %21, %22 : vector<16x128xf32>
    %24 = math.log %23 : vector<16x128xf32>
    %cst_11 = arith.constant 0.0868588984 : f32
    %25 = vector.broadcast %cst_11 : f32 to vector<16x128xf32>
    %26 = arith.mulf %25, %24 : vector<16x128xf32>
    %cst_12 = arith.constant 8.000000e-01 : f32
    %27 = vector.broadcast %cst_12 : f32 to vector<16x128xf32>
    %28 = arith.addf %26, %27 : vector<16x128xf32>
    %c0_13 = arith.constant 0 : index
    %c0_14 = arith.constant 0 : index
    %c0_15 = arith.constant 0 : index
    %29 = vector.load %arg6[%c0_13, %c0_14, %c0_15] : memref<1x16x128xf32, #tpu.memory_space<vmem>>, vector<1x16x128xf32>
    %30 = vector.shape_cast %29 : vector<1x16x128xf32> to vector<16x128xf32>
    %31 = vector.shape_cast %28 : vector<16x128xf32> to vector<1x16x128xf32>
    tpu.vector_store %arg6[%c0_13, %c0_14, %c0_15], %31 {strides = array<i32>} : memref<1x16x128xf32, #tpu.memory_space<vmem>>, vector<1x16x128xf32>,
    return
  }
  func.func @transform_0(%arg0: i32, %arg1: i32) -> (i32, i32, i32) {
    %c0_i32 = arith.constant 0 : i32
    %c0_i32_0 = arith.constant 0 : i32
    return %arg0, %arg1, %c0_i32 : i32, i32, i32
  }
  func.func @transform_1(%arg0: i32, %arg1: i32) -> (i32, i32, i32) {
    %c1_i32 = arith.constant 1 : i32
    %0 = arith.addi %arg1, %c1_i32 : i32
    %c16_i32 = arith.constant 16 : i32
    %1 = arith.muli %0, %c16_i32 : i32
    %c0_i32 = arith.constant 0 : i32
    %c0_i32_0 = arith.constant 0 : i32
    return %arg0, %1, %c0_i32 : i32, i32, i32
  }
  func.func @transform_2(%arg0: i32, %arg1: i32) -> (i32, i32) {
    %c0_i32 = arith.constant 0 : i32
    %c0_i32_0 = arith.constant 0 : i32
    %c0_i32_1 = arith.constant 0 : i32
    return %c0_i32, %c0_i32_0 : i32, i32
  }
  func.func @transform_3(%arg0: i32, %arg1: i32) -> (i32, i32) {
    %c0_i32 = arith.constant 0 : i32
    %c0_i32_0 = arith.constant 0 : i32
    %c0_i32_1 = arith.constant 0 : i32
    return %c0_i32, %c0_i32_0 : i32, i32
  }
  func.func @transform_4(%arg0: i32, %arg1: i32) -> (i32, i32, i32) {
    %c0_i32 = arith.constant 0 : i32
    %c0_i32_0 = arith.constant 0 : i32
    return %arg0, %c0_i32, %arg1 : i32, i32, i32
  }
}

</mosaic_0001>

<llo_original>
// kernel: tpu_custom_call.1
$region0: #{tpu_custom_call.1}
  #allocation0 [shape = 'u32[]', space=smem, size = 0x4, offset = 0x4, fixed_abs, tag = 'smem constant byte address 0x4 - core index']
  #allocation1 [shape = 'u32[72,128]{1,0:T(1,128)}', space=vmem, size = 0x9000, scoped, tag = 'internal scratch']
  %s0 = inlined_call_operand.vmem [shape: f32[2,264,16], index: 0, kind: input, shape index: {}]
  %s1 = inlined_call_operand.vmem [shape: f32[2,264,16], index: 1, kind: input, shape index: {}]
  %s2 = inlined_call_operand.vmem [shape: bf16[80,256], index: 2, kind: input, shape index: {}]
  %s3 = inlined_call_operand.vmem [shape: f32[16,128], index: 3, kind: input, shape index: {}]
  %s4 = inlined_call_operand.hbm [shape: f32[2,16,256], index: 4, kind: output, shape index: {}]
  %s5 = sld [smem:[#allocation0]]
  $region49: #{tpu_custom_call.1} parent=0
    _
  %s7 = ssub.s32 1, %s5
  %s8 = scalar_select 0, %s7, %s5
  $region1: #{tpu_custom_call.1} parent=0
    #allocation2 [shape = 'u8[16384]{0}', space=vmem, size = 0x4000, scoped, tag = 'output window, operand 0']
    #allocation3 [shape = 's32[2]{0}', space=sflag, size = 0x8, scoped, tag = 'scoped memory for tpu_custom_call.1']
    %9 = vsyncpa [#allocation3], 0
    %s10 = scalar_lea.sflag [#allocation3], 1
    %11 = vsyncpa %s10, 0
    loop: start=0, step=1, limit=6
    $region2: #{tpu_custom_call.1} parent=1 // loop_pre_header
      _
    $region3: #{tpu_custom_call.1} parent=1 // loop_header
      %s13 = sphi 0, %s17
      %p14 = scmp.ge.s32.totalorder %s13, 6
      %s20 = sphi 0, %s32
      %s21 = sphi 0, %s28
      %s22 = sphi 0, %s20
      %s23 = sphi 0, %s21
      %s24 = sphi 0, %s22
      %s25 = sphi 0, %s23
      %s37 = sphi 0, %s39
      %s40 = sphi 0, %s37
      %s41 = sphi 0, %s40
      %s57 = sphi 0, %s41
      %s69 = sphi 0, %s71
      %s72 = sphi 0, %s69
      %s73 = sphi 0, %s72
      %s89 = sphi 0, %s73
      %s93 = sphi 0, %s93
      %s95 = sphi 0, %s93
      %s96 = sphi 0, %s95
      %s110 = sphi 0, %s96
      %s114 = sphi 0, %s114
      %s116 = sphi 0, %s114
      %s117 = sphi 0, %s116
      %s131 = sphi 0, %s117
      %s139 = sphi 0, %s141
      %s142 = sphi 0, %s139
      %s143 = sphi 0, %s142
      %s159 = sphi 0, %s143
    $region4: #{tpu_custom_call.1} parent=1 // loop_header_branch
      %16 = sbr.rel (%p14) target = $region8
    $region5: #{tpu_custom_call.1} parent=1 // loop_body
      %s18 = ssub.s32 %s13, 1
      %s19 = ssub.s32 %s13, 2
      %s26 = sadd.s32 1, %s21
      %p27 = scmp.ge.s32.totalorder %s26, 2
      %s28 = scalar_select %p27, 0, %s26
      %s29 = sadd.s32 1, %s20
      %s30 = scalar_select %p27, %s29, %s20
      %p31 = scmp.ge.s32.totalorder %s30, 2
      %s32 = scalar_select %p31, 0, %s30
      %s33 = ssub.s32 %s20, %s32
      %s34 = ssub.s32 %s21, %s28
      %s35 = sor.u32 %s33, %s34
      %p36 = scmp.eq.s32.totalorder %s35, 0
      %s38 = sadd.s32 %s37, 1
      %s39 = scalar_select %p36, %s37, %s38
      %p42 = pneg %p36
      %p43 = scmp.eq.s32.totalorder %s13, 3
      %p44 = por %p42, %p43
      %p45 = scmp.ne.s32.totalorder %s37, %s40
      %p46 = scmp.eq.s32.totalorder %s13, 0
      %p47 = por %p45, %p46
      %p48 = scmp.ne.s32.totalorder %s37, %s40
      %p49 = scmp.eq.s32.totalorder %s18, 3
      %p50 = por %p48, %p49
      %p51 = scmp.ne.s32.totalorder %s40, %s41
      %p52 = scmp.eq.s32.totalorder %s18, 0
      %p53 = por %p51, %p52
      %p54 = scmp.ne.s32.totalorder %s40, %s41
      %p55 = scmp.eq.s32.totalorder %s19, 3
      %p56 = por %p54, %p55
      %p58 = scmp.ne.s32.totalorder %s41, %s57
      %p59 = scmp.eq.s32.totalorder %s19, 0
      %p60 = por %p58, %p59
      %s61 = sadd.s32 %s21, 1
      %s62 = smul.u32 %s61, 16
      %s63 = sadd.s32 %s28, 1
      %s64 = smul.u32 %s63, 16
      %s65 = ssub.s32 %s20, %s32
      %s66 = ssub.s32 %s62, %s64
      %s67 = sor.u32 %s65, %s66
      %p68 = scmp.eq.s32.totalorder %s67, 0
      %s70 = sadd.s32 %s69, 1
      %s71 = scalar_select %p68, %s69, %s70
      %p74 = pneg %p68
      %p75 = scmp.eq.s32.totalorder %s13, 3
      %p76 = por %p74, %p75
      %p77 = scmp.ne.s32.totalorder %s69, %s72
      %p78 = scmp.eq.s32.totalorder %s13, 0
      %p79 = por %p77, %p78
      %p80 = scmp.ne.s32.totalorder %s69, %s72
      %p81 = scmp.eq.s32.totalorder %s18, 3
      %p82 = por %p80, %p81
      %p83 = scmp.ne.s32.totalorder %s72, %s73
      %p84 = scmp.eq.s32.totalorder %s18, 0
      %p85 = por %p83, %p84
      %p86 = scmp.ne.s32.totalorder %s72, %s73
      %p87 = scmp.eq.s32.totalorder %s19, 3
      %p88 = por %p86, %p87
      %p90 = scmp.ne.s32.totalorder %s73, %s89
      %p91 = scmp.eq.s32.totalorder %s19, 0
      %p92 = por %p90, %p91
      %s94 = sadd.s32 %s93, 1
      %p97 = scmp.eq.s32.totalorder %s13, 3
      %p98 = scmp.ne.s32.totalorder %s93, %s95
      %p99 = scmp.eq.s32.totalorder %s13, 0
      %p100 = por %p98, %p99
      %p101 = scmp.ne.s32.totalorder %s93, %s95
      %p102 = scmp.eq.s32.totalorder %s18, 3
      %p103 = por %p101, %p102
      %p104 = scmp.ne.s32.totalorder %s95, %s96
      %p105 = scmp.eq.s32.totalorder %s18, 0
      %p106 = por %p104, %p105
      %p107 = scmp.ne.s32.totalorder %s95, %s96
      %p108 = scmp.eq.s32.totalorder %s19, 3
      %p109 = por %p107, %p108
      %p111 = scmp.ne.s32.totalorder %s96, %s110
      %p112 = scmp.eq.s32.totalorder %s19, 0
      %p113 = por %p111, %p112
      %s115 = sadd.s32 %s114, 1
      %p118 = scmp.eq.s32.totalorder %s13, 3
      %p119 = scmp.ne.s32.totalorder %s114, %s116
      %p120 = scmp.eq.s32.totalorder %s13, 0
      %p121 = por %p119, %p120
      %p122 = scmp.ne.s32.totalorder %s114, %s116
      %p123 = scmp.eq.s32.totalorder %s18, 3
      %p124 = por %p122, %p123
      %p125 = scmp.ne.s32.totalorder %s116, %s117
      %p126 = scmp.eq.s32.totalorder %s18, 0
      %p127 = por %p125, %p126
      %p128 = scmp.ne.s32.totalorder %s116, %s117
      %p129 = scmp.eq.s32.totalorder %s19, 3
      %p130 = por %p128, %p129
      %p132 = scmp.ne.s32.totalorder %s117, %s131
      %p133 = scmp.eq.s32.totalorder %s19, 0
      %p134 = por %p132, %p133
      %s135 = ssub.s32 %s20, %s32
      %s136 = ssub.s32 %s21, %s28
      %s137 = sor.u32 %s135, %s136
      %p138 = scmp.eq.s32.totalorder %s137, 0
      %s140 = sadd.s32 %s139, 1
      %s141 = scalar_select %p138, %s139, %s140
      %p144 = pneg %p138
      %p145 = scmp.eq.s32.totalorder %s13, 3
      %p146 = por %p144, %p145
      %p147 = scmp.ne.s32.totalorder %s139, %s142
      %p148 = scmp.eq.s32.totalorder %s13, 0
      %p149 = por %p147, %p148
      %p150 = scmp.ne.s32.totalorder %s139, %s142
      %p151 = scmp.eq.s32.totalorder %s18, 3
      %p152 = por %p150, %p151
      %p153 = scmp.ne.s32.totalorder %s142, %s143
      %p154 = scmp.eq.s32.totalorder %s18, 0
      %p155 = por %p153, %p154
      %p156 = scmp.ne.s32.totalorder %s142, %s143
      %p157 = scmp.eq.s32.totalorder %s19, 3
      %p158 = por %p156, %p157
      %p160 = scmp.ne.s32.totalorder %s143, %s159
      %p161 = scmp.eq.s32.totalorder %s19, 0
      %p162 = por %p160, %p161
      %p163 = scmp.le.s32.totalorder 1, %s13
      %p164 = scmp.lt.s32.totalorder %s13, 5
      %p165 = pnand %p163, %p164
      %p166 = pneg %p165
      // Predicated region
      $region9: #{tpu_custom_call.1} parent=5 // pred_check
        _
      $region10: #{tpu_custom_call.1} parent=5 // pred_check_branch
        %168 = sbr.rel (%p165) target = $region12
      $region11: #{tpu_custom_call.1} parent=5 // pred_region
        %s169 = ssub.s32 %s13, 1
        // Predicated region
        $region13: #{tpu_custom_call.1} parent=11 // pred_check
          %p170 = pneg %p106
        $region14: #{tpu_custom_call.1} parent=11 // pred_check_branch
          %172 = sbr.rel (%p170) target = $region16
        $region15: #{tpu_custom_call.1} parent=11 // pred_region
          _
        $region16: #{tpu_custom_call.1} parent=11 // pred_fallthru
          _
        // Predicated region
        $region17: #{tpu_custom_call.1} parent=11 // pred_check
          %p173 = pneg %p127
        $region18: #{tpu_custom_call.1} parent=11 // pred_check_branch
          %175 = sbr.rel (%p173) target = $region20
        $region19: #{tpu_custom_call.1} parent=11 // pred_region
          _
        $region20: #{tpu_custom_call.1} parent=11 // pred_fallthru
          _
      $region12: #{tpu_custom_call.1} parent=5 // pred_fallthru
        _
      %p176 = scmp.lt.s32.totalorder %s13, 4
      // Predicated region
      $region21: #{tpu_custom_call.1} parent=5 // pred_check
        %p177 = pneg %p176
      $region22: #{tpu_custom_call.1} parent=5 // pred_check_branch
        %179 = sbr.rel (%p177) target = $region24
      $region23: #{tpu_custom_call.1} parent=5 // pred_region
        // Predicated region
        $region25: #{tpu_custom_call.1} parent=23 // pred_check
          %p180 = pneg %p47
        $region26: #{tpu_custom_call.1} parent=23 // pred_check_branch
          %182 = sbr.rel (%p180) target = $region28
        $region27: #{tpu_custom_call.1} parent=23 // pred_region
          %s183 = smul.u32 16, %s21
          %s184 = ssub.s32 33, %s183
          %p185 = scmp.lt.s32.totalorder %s184, 16
          %s186 = scalar_select %p185, %s184, 16
          %s187 = smul.u32 8, %s186
          %p188 = scmp.lt.s32.totalorder %s20, 1
          %s189 = scalar_select %p188, %s20, 1
          %p190 = scmp.lt.s32.totalorder %s183, 32
          %s191 = scalar_select %p190, %s183, 32
          %s192 = smul.addr %s189, 33
          %s193 = sadd.s32 %s191, %s192
          %s194 = smul.addr %s193, 8
          %s195 = scalar_lea.vmem %s0, %s194
          %s196 = smul.u32 16, %s21
          %s197 = ssub.s32 33, %s196
          %p198 = scmp.lt.s32.totalorder %s197, 16
          %s199 = scalar_select %p198, %s197, 16
          %s200 = smul.u32 8, %s199
        $region28: #{tpu_custom_call.1} parent=23 // pred_fallthru
          _
        // Predicated region
        $region29: #{tpu_custom_call.1} parent=23 // pred_check
          %p201 = pneg %p79
        $region30: #{tpu_custom_call.1} parent=23 // pred_check_branch
          %203 = sbr.rel (%p201) target = $region32
        $region31: #{tpu_custom_call.1} parent=23 // pred_region
          %s204 = sadd.s32 %s21, 1
          %s205 = smul.u32 %s204, 16
          %p206 = scmp.lt.s32.totalorder %s20, 1
          %s207 = scalar_select %p206, %s20, 1
          %p208 = scmp.lt.s32.totalorder %s205, 32
          %s209 = scalar_select %p208, %s205, 32
          %s210 = smul.addr %s207, 33
          %s211 = sadd.s32 %s209, %s210
          %s212 = smul.addr %s211, 8
          %s213 = scalar_lea.vmem %s1, %s212
          %s214 = sadd.s32 %s21, 1
          %s215 = smul.u32 %s214, 16
        $region32: #{tpu_custom_call.1} parent=23 // pred_fallthru
          _
      $region24: #{tpu_custom_call.1} parent=5 // pred_fallthru
        _
      %p216 = scmp.le.s32.totalorder 1, %s13
      %p217 = scmp.lt.s32.totalorder %s13, 5
      %p218 = pnand %p216, %p217
      %p219 = pneg %p218
      // Predicated region
      $region33: #{tpu_custom_call.1} parent=5 // pred_check
        _
      $region34: #{tpu_custom_call.1} parent=5 // pred_check_branch
        %221 = sbr.rel (%p218) target = $region36
      $region35: #{tpu_custom_call.1} parent=5 // pred_region
        %s222 = ssub.s32 %s13, 1
        %s223 = smul.u32 16, %s23
        %s224 = ssub.s32 33, %s223
        %p225 = scmp.lt.s32.totalorder %s224, 16
        %s226 = scalar_select %p225, %s224, 16
        %s227 = smul.u32 8, %s226
        %p228 = scmp.lt.s32.totalorder %s22, 1
        %s229 = scalar_select %p228, %s22, 1
        %p230 = scmp.lt.s32.totalorder %s223, 32
        %s231 = scalar_select %p230, %s223, 32
        %s232 = smul.addr %s229, 33
        %s233 = sadd.s32 %s231, %s232
        %s234 = smul.addr %s233, 8
        %s235 = scalar_lea.vmem %s0, %s234
        %p236 = pneg %p53
        %p237 = pneg %p50
        %s238 = sadd.s32 %s23, 1
        %s239 = smul.u32 %s238, 16
        %p240 = scmp.lt.s32.totalorder %s22, 1
        %s241 = scalar_select %p240, %s22, 1
        %p242 = scmp.lt.s32.totalorder %s239, 32
        %s243 = scalar_select %p242, %s239, 32
        %s244 = smul.addr %s241, 33
        %s245 = sadd.s32 %s243, %s244
        %s246 = smul.addr %s245, 8
        %s247 = scalar_lea.vmem %s1, %s246
        %p248 = pneg %p85
        %p249 = pneg %p82
        %p250 = pneg %p106
        %p251 = pneg %p103
        %p252 = pneg %p127
        %p253 = pneg %p124
        %p254 = pneg %p155
        %p255 = pneg %p152
        %s256 = sand.u32 %s142, 1
        %s257 = scalar_lea.sflag [#allocation3], %s256
        %s258 = sand.u32 %s142, 1
        %s259 = smul.addr %s258, 16
        %s260 = scalar_lea.vmem [#allocation2], %s259
        %s261 = smul.u32 16, %s23
        %s262 = ssub.s32 33, %s261
        %p263 = scmp.lt.s32.totalorder %s262, 16
        %s264 = scalar_select %p263, %s262, 16
        %s265 = smul.u32 8, %s264
        %p266 = scmp.lt.s32.totalorder %s22, 1
        %s267 = scalar_select %p266, %s22, 1
        %p268 = scmp.lt.s32.totalorder %s261, 32
        %s269 = scalar_select %p268, %s261, 32
        %s270 = smul.addr %s267, 33
        %s271 = sadd.s32 %s269, %s270
        %s272 = smul.addr %s271, 8
        %s273 = scalar_lea.vmem %s0, %s272
        %s274 = smul.u32 16, %s23
        %s275 = ssub.s32 33, %s274
        %p276 = scmp.lt.s32.totalorder %s275, 16
        %s277 = scalar_select %p276, %s275, 16
        %s278 = smul.u32 8, %s277
        %s279 = sadd.s32 %s23, 1
        %s280 = smul.u32 %s279, 16
        %p281 = scmp.lt.s32.totalorder %s22, 1
        %s282 = scalar_select %p281, %s22, 1
        %p283 = scmp.lt.s32.totalorder %s280, 32
        %s284 = scalar_select %p283, %s280, 32
        %s285 = smul.addr %s282, 33
        %s286 = sadd.s32 %s284, %s285
        %s287 = smul.addr %s286, 8
        %s288 = scalar_lea.vmem %s1, %s287
        %s289 = sadd.s32 %s23, 1
        %s290 = smul.u32 %s289, 16
        %v292 = vld [vmem:[%s273] sm:$0xff]
        %v293 = vld [vmem:[%s273 + $0x8] sm:$0xff]
        %v294 = vld [vmem:[%s273 + $0x10] sm:$0xff]
        %v295 = vld [vmem:[%s273 + $0x18] sm:$0xff]
        %v296 = vld [vmem:[%s273 + $0x20] sm:$0xff]
        %v297 = vld [vmem:[%s273 + $0x28] sm:$0xff]
        %v298 = vld [vmem:[%s273 + $0x30] sm:$0xff]
        %v299 = vld [vmem:[%s273 + $0x38] sm:$0xff]
        %v300 = vld [vmem:[%s273 + $0x40] sm:$0xff]
        %v301 = vld [vmem:[%s273 + $0x48] sm:$0xff]
        %v302 = vld [vmem:[%s273 + $0x50] sm:$0xff]
        %v303 = vld [vmem:[%s273 + $0x58] sm:$0xff]
        %v304 = vld [vmem:[%s273 + $0x60] sm:$0xff]
        %v305 = vld [vmem:[%s273 + $0x68] sm:$0xff]
        %v306 = vld [vmem:[%s273 + $0x70] sm:$0xff]
        %v307 = vld [vmem:[%s273 + $0x78] sm:$0xff]
        %v308 = vld [vmem:[%s288] sm:$0xff]
        %vm326 = vcmask 1046528
        %v327 = vrot.slane %v292, 1
        %v328 = vrot.slane %v293, 1
        %v329 = vsel %vm326, %v327, %v328
        %v330 = vrot.slane %v294, 1
        %v331 = vsel %vm326, %v328, %v330
        %v332 = vrot.slane %v295, 1
        %v333 = vsel %vm326, %v330, %v332
        %v334 = vrot.slane %v296, 1
        %v335 = vsel %vm326, %v332, %v334
        %v336 = vrot.slane %v297, 1
        %v337 = vsel %vm326, %v334, %v336
        %v338 = vrot.slane %v298, 1
        %v339 = vsel %vm326, %v336, %v338
        %v340 = vrot.slane %v299, 1
        %v341 = vsel %vm326, %v338, %v340
        %v342 = vrot.slane %v300, 1
        %v343 = vsel %vm326, %v340, %v342
        %v344 = vrot.slane %v301, 1
        %v345 = vsel %vm326, %v342, %v344
        %v346 = vrot.slane %v302, 1
        %v347 = vsel %vm326, %v344, %v346
        %v348 = vrot.slane %v303, 1
        %v349 = vsel %vm326, %v346, %v348
        %v350 = vrot.slane %v304, 1
        %v351 = vsel %vm326, %v348, %v350
        %v352 = vrot.slane %v305, 1
        %v353 = vsel %vm326, %v350, %v352
        %v354 = vrot.slane %v306, 1
        %v355 = vsel %vm326, %v352, %v354
        %v356 = vrot.slane %v307, 1
        %v357 = vsel %vm326, %v354, %v356
        %v358 = vrot.slane %v308, 1
        %v359 = vsel %vm326, %v356, %v358
        %360 = vrot.lane.b32.xlu0 %v329, 16
        %v361 = vpop.permute.xlu0 %360
        %362 = vrot.lane.b32.xlu0 %v331, 16
        %v363 = vpop.permute.xlu0 %362
        %364 = vrot.lane.b32.xlu0 %v333, 16
        %v365 = vpop.permute.xlu0 %364
        %366 = vrot.lane.b32.xlu0 %v335, 16
        %v367 = vpop.permute.xlu0 %366
        %368 = vrot.lane.b32.xlu0 %v337, 16
        %v369 = vpop.permute.xlu0 %368
        %370 = vrot.lane.b32.xlu0 %v339, 16
        %v371 = vpop.permute.xlu0 %370
        %372 = vrot.lane.b32.xlu0 %v341, 16
        %v373 = vpop.permute.xlu0 %372
        %374 = vrot.lane.b32.xlu0 %v343, 16
        %v375 = vpop.permute.xlu0 %374
        %376 = vrot.lane.b32.xlu0 %v345, 16
        %v377 = vpop.permute.xlu0 %376
        %378 = vrot.lane.b32.xlu0 %v347, 16
        %v379 = vpop.permute.xlu0 %378
        %380 = vrot.lane.b32.xlu0 %v349, 16
        %v381 = vpop.permute.xlu0 %380
        %382 = vrot.lane.b32.xlu0 %v351, 16
        %v383 = vpop.permute.xlu0 %382
        %384 = vrot.lane.b32.xlu0 %v353, 16
        %v385 = vpop.permute.xlu0 %384
        %386 = vrot.lane.b32.xlu0 %v355, 16
        %v387 = vpop.permute.xlu0 %386
        %388 = vrot.lane.b32.xlu0 %v357, 16
        %v389 = vpop.permute.xlu0 %388
        %390 = vrot.lane.b32.xlu0 %v359, 16
        %v391 = vpop.permute.xlu0 %390
        %vm408 = vcmask 1045504
        %v409 = vrot.slane %v292, 2
        %v410 = vrot.slane %v293, 2
        %v411 = vsel %vm408, %v409, %v410
        %v412 = vrot.slane %v294, 2
        %v413 = vsel %vm408, %v410, %v412
        %v414 = vrot.slane %v295, 2
        %v415 = vsel %vm408, %v412, %v414
        %v416 = vrot.slane %v296, 2
        %v417 = vsel %vm408, %v414, %v416
        %v418 = vrot.slane %v297, 2
        %v419 = vsel %vm408, %v416, %v418
        %v420 = vrot.slane %v298, 2
        %v421 = vsel %vm408, %v418, %v420
        %v422 = vrot.slane %v299, 2
        %v423 = vsel %vm408, %v420, %v422
        %v424 = vrot.slane %v300, 2
        %v425 = vsel %vm408, %v422, %v424
        %v426 = vrot.slane %v301, 2
        %v427 = vsel %vm408, %v424, %v426
        %v428 = vrot.slane %v302, 2
        %v429 = vsel %vm408, %v426, %v428
        %v430 = vrot.slane %v303, 2
        %v431 = vsel %vm408, %v428, %v430
        %v432 = vrot.slane %v304, 2
        %v433 = vsel %vm408, %v430, %v432
        %v434 = vrot.slane %v305, 2
        %v435 = vsel %vm408, %v432, %v434
        %v436 = vrot.slane %v306, 2
        %v437 = vsel %vm408, %v434, %v436
        %v438 = vrot.slane %v307, 2
        %v439 = vsel %vm408, %v436, %v438
        %v440 = vrot.slane %v308, 2
        %v441 = vsel %vm408, %v438, %v440
        %442 = vrot.lane.b32.xlu0 %v411, 32
        %v443 = vpop.permute.xlu0 %442
        %444 = vrot.lane.b32.xlu0 %v413, 32
        %v445 = vpop.permute.xlu0 %444
        %446 = vrot.lane.b32.xlu0 %v415, 32
        %v447 = vpop.permute.xlu0 %446
        %448 = vrot.lane.b32.xlu0 %v417, 32
        %v449 = vpop.permute.xlu0 %448
        %450 = vrot.lane.b32.xlu0 %v419, 32
        %v451 = vpop.permute.xlu0 %450
        %452 = vrot.lane.b32.xlu0 %v421, 32
        %v453 = vpop.permute.xlu0 %452
        %454 = vrot.lane.b32.xlu0 %v423, 32
        %v455 = vpop.permute.xlu0 %454
        %456 = vrot.lane.b32.xlu0 %v425, 32
        %v457 = vpop.permute.xlu0 %456
        %458 = vrot.lane.b32.xlu0 %v427, 32
        %v459 = vpop.permute.xlu0 %458
        %460 = vrot.lane.b32.xlu0 %v429, 32
        %v461 = vpop.permute.xlu0 %460
        %462 = vrot.lane.b32.xlu0 %v431, 32
        %v463 = vpop.permute.xlu0 %462
        %464 = vrot.lane.b32.xlu0 %v433, 32
        %v465 = vpop.permute.xlu0 %464
        %466 = vrot.lane.b32.xlu0 %v435, 32
        %v467 = vpop.permute.xlu0 %466
        %468 = vrot.lane.b32.xlu0 %v437, 32
        %v469 = vpop.permute.xlu0 %468
        %470 = vrot.lane.b32.xlu0 %v439, 32
        %v471 = vpop.permute.xlu0 %470
        %472 = vrot.lane.b32.xlu0 %v441, 32
        %v473 = vpop.permute.xlu0 %472
        %vm490 = vcmask 1044480
        %v491 = vrot.slane %v292, 3
        %v492 = vrot.slane %v293, 3
        %v493 = vsel %vm490, %v491, %v492
        %v494 = vrot.slane %v294, 3
        %v495 = vsel %vm490, %v492, %v494
        %v496 = vrot.slane %v295, 3
        %v497 = vsel %vm490, %v494, %v496
        %v498 = vrot.slane %v296, 3
        %v499 = vsel %vm490, %v496, %v498
        %v500 = vrot.slane %v297, 3
        %v501 = vsel %vm490, %v498, %v500
        %v502 = vrot.slane %v298, 3
        %v503 = vsel %vm490, %v500, %v502
        %v504 = vrot.slane %v299, 3
        %v505 = vsel %vm490, %v502, %v504
        %v506 = vrot.slane %v300, 3
        %v507 = vsel %vm490, %v504, %v506
        %v508 = vrot.slane %v301, 3
        %v509 = vsel %vm490, %v506, %v508
        %v510 = vrot.slane %v302, 3
        %v511 = vsel %vm490, %v508, %v510
        %v512 = vrot.slane %v303, 3
        %v513 = vsel %vm490, %v510, %v512
        %v514 = vrot.slane %v304, 3
        %v515 = vsel %vm490, %v512, %v514
        %v516 = vrot.slane %v305, 3
        %v517 = vsel %vm490, %v514, %v516
        %v518 = vrot.slane %v306, 3
        %v519 = vsel %vm490, %v516, %v518
        %v520 = vrot.slane %v307, 3
        %v521 = vsel %vm490, %v518, %v520
        %v522 = vrot.slane %v308, 3
        %v523 = vsel %vm490, %v520, %v522
        %524 = vrot.lane.b32.xlu0 %v493, 48
        %v525 = vpop.permute.xlu0 %524
        %526 = vrot.lane.b32.xlu0 %v495, 48
        %v527 = vpop.permute.xlu0 %526
        %528 = vrot.lane.b32.xlu0 %v497, 48
        %v529 = vpop.permute.xlu0 %528
        %530 = vrot.lane.b32.xlu0 %v499, 48
        %v531 = vpop.permute.xlu0 %530
        %532 = vrot.lane.b32.xlu0 %v501, 48
        %v533 = vpop.permute.xlu0 %532
        %534 = vrot.lane.b32.xlu0 %v503, 48
        %v535 = vpop.permute.xlu0 %534
        %536 = vrot.lane.b32.xlu0 %v505, 48
        %v537 = vpop.permute.xlu0 %536
        %538 = vrot.lane.b32.xlu0 %v507, 48
        %v539 = vpop.permute.xlu0 %538
        %540 = vrot.lane.b32.xlu0 %v509, 48
        %v541 = vpop.permute.xlu0 %540
        %542 = vrot.lane.b32.xlu0 %v511, 48
        %v543 = vpop.permute.xlu0 %542
        %544 = vrot.lane.b32.xlu0 %v513, 48
        %v545 = vpop.permute.xlu0 %544
        %546 = vrot.lane.b32.xlu0 %v515, 48
        %v547 = vpop.permute.xlu0 %546
        %548 = vrot.lane.b32.xlu0 %v517, 48
        %v549 = vpop.permute.xlu0 %548
        %550 = vrot.lane.b32.xlu0 %v519, 48
        %v551 = vpop.permute.xlu0 %550
        %552 = vrot.lane.b32.xlu0 %v521, 48
        %v553 = vpop.permute.xlu0 %552
        %554 = vrot.lane.b32.xlu0 %v523, 48
        %v555 = vpop.permute.xlu0 %554
        %vm572 = vcmask 1043456
        %v573 = vrot.slane %v292, 4
        %v574 = vrot.slane %v293, 4
        %v575 = vsel %vm572, %v573, %v574
        %v576 = vrot.slane %v294, 4
        %v577 = vsel %vm572, %v574, %v576
        %v578 = vrot.slane %v295, 4
        %v579 = vsel %vm572, %v576, %v578
        %v580 = vrot.slane %v296, 4
        %v581 = vsel %vm572, %v578, %v580
        %v582 = vrot.slane %v297, 4
        %v583 = vsel %vm572, %v580, %v582
        %v584 = vrot.slane %v298, 4
        %v585 = vsel %vm572, %v582, %v584
        %v586 = vrot.slane %v299, 4
        %v587 = vsel %vm572, %v584, %v586
        %v588 = vrot.slane %v300, 4
        %v589 = vsel %vm572, %v586, %v588
        %v590 = vrot.slane %v301, 4
        %v591 = vsel %vm572, %v588, %v590
        %v592 = vrot.slane %v302, 4
        %v593 = vsel %vm572, %v590, %v592
        %v594 = vrot.slane %v303, 4
        %v595 = vsel %vm572, %v592, %v594
        %v596 = vrot.slane %v304, 4
        %v597 = vsel %vm572, %v594, %v596
        %v598 = vrot.slane %v305, 4
        %v599 = vsel %vm572, %v596, %v598
        %v600 = vrot.slane %v306, 4
        %v601 = vsel %vm572, %v598, %v600
        %v602 = vrot.slane %v307, 4
        %v603 = vsel %vm572, %v600, %v602
        %v604 = vrot.slane %v308, 4
        %v605 = vsel %vm572, %v602, %v604
        %606 = vrot.lane.b32.xlu0 %v575, 64
        %v607 = vpop.permute.xlu0 %606
        %608 = vrot.lane.b32.xlu0 %v577, 64
        %v609 = vpop.permute.xlu0 %608
        %610 = vrot.lane.b32.xlu0 %v579, 64
        %v611 = vpop.permute.xlu0 %610
        %612 = vrot.lane.b32.xlu0 %v581, 64
        %v613 = vpop.permute.xlu0 %612
        %614 = vrot.lane.b32.xlu0 %v583, 64
        %v615 = vpop.permute.xlu0 %614
        %616 = vrot.lane.b32.xlu0 %v585, 64
        %v617 = vpop.permute.xlu0 %616
        %618 = vrot.lane.b32.xlu0 %v587, 64
        %v619 = vpop.permute.xlu0 %618
        %620 = vrot.lane.b32.xlu0 %v589, 64
        %v621 = vpop.permute.xlu0 %620
        %622 = vrot.lane.b32.xlu0 %v591, 64
        %v623 = vpop.permute.xlu0 %622
        %624 = vrot.lane.b32.xlu0 %v593, 64
        %v625 = vpop.permute.xlu0 %624
        %626 = vrot.lane.b32.xlu0 %v595, 64
        %v627 = vpop.permute.xlu0 %626
        %628 = vrot.lane.b32.xlu0 %v597, 64
        %v629 = vpop.permute.xlu0 %628
        %630 = vrot.lane.b32.xlu0 %v599, 64
        %v631 = vpop.permute.xlu0 %630
        %632 = vrot.lane.b32.xlu0 %v601, 64
        %v633 = vpop.permute.xlu0 %632
        %634 = vrot.lane.b32.xlu0 %v603, 64
        %v635 = vpop.permute.xlu0 %634
        %636 = vrot.lane.b32.xlu0 %v605, 64
        %v637 = vpop.permute.xlu0 %636
        %vm654 = vcmask 130048
        %v655 = vsel %vm654, %v292, %v361
        %v656 = vsel %vm654, %v293, %v363
        %v657 = vsel %vm654, %v294, %v365
        %v658 = vsel %vm654, %v295, %v367
        %v659 = vsel %vm654, %v296, %v369
        %v660 = vsel %vm654, %v297, %v371
        %v661 = vsel %vm654, %v298, %v373
        %v662 = vsel %vm654, %v299, %v375
        %v663 = vsel %vm654, %v300, %v377
        %v664 = vsel %vm654, %v301, %v379
        %v665 = vsel %vm654, %v302, %v381
        %v666 = vsel %vm654, %v303, %v383
        %v667 = vsel %vm654, %v304, %v385
        %v668 = vsel %vm654, %v305, %v387
        %v669 = vsel %vm654, %v306, %v389
        %v670 = vsel %vm654, %v307, %v391
        %vm671 = vcmask 261120
        %v672 = vsel %vm671, %v655, %v443
        %v673 = vsel %vm671, %v656, %v445
        %v674 = vsel %vm671, %v657, %v447
        %v675 = vsel %vm671, %v658, %v449
        %v676 = vsel %vm671, %v659, %v451
        %v677 = vsel %vm671, %v660, %v453
        %v678 = vsel %vm671, %v661, %v455
        %v679 = vsel %vm671, %v662, %v457
        %v680 = vsel %vm671, %v663, %v459
        %v681 = vsel %vm671, %v664, %v461
        %v682 = vsel %vm671, %v665, %v463
        %v683 = vsel %vm671, %v666, %v465
        %v684 = vsel %vm671, %v667, %v467
        %v685 = vsel %vm671, %v668, %v469
        %v686 = vsel %vm671, %v669, %v471
        %v687 = vsel %vm671, %v670, %v473
        %vm688 = vcmask 392192
        %v689 = vsel %vm688, %v672, %v525
        %v690 = vsel %vm688, %v673, %v527
        %v691 = vsel %vm688, %v674, %v529
        %v692 = vsel %vm688, %v675, %v531
        %v693 = vsel %vm688, %v676, %v533
        %v694 = vsel %vm688, %v677, %v535
        %v695 = vsel %vm688, %v678, %v537
        %v696 = vsel %vm688, %v679, %v539
        %v697 = vsel %vm688, %v680, %v541
        %v698 = vsel %vm688, %v681, %v543
        %v699 = vsel %vm688, %v682, %v545
        %v700 = vsel %vm688, %v683, %v547
        %v701 = vsel %vm688, %v684, %v549
        %v702 = vsel %vm688, %v685, %v551
        %v703 = vsel %vm688, %v686, %v553
        %v704 = vsel %vm688, %v687, %v555
        %vm705 = vcmask 523264
        %v706 = vsel %vm705, %v689, %v607
        %v707 = vsel %vm705, %v690, %v609
        %v708 = vsel %vm705, %v691, %v611
        %v709 = vsel %vm705, %v692, %v613
        %v710 = vsel %vm705, %v693, %v615
        %v711 = vsel %vm705, %v694, %v617
        %v712 = vsel %vm705, %v695, %v619
        %v713 = vsel %vm705, %v696, %v621
        %v714 = vsel %vm705, %v697, %v623
        %v715 = vsel %vm705, %v698, %v625
        %v716 = vsel %vm705, %v699, %v627
        %v717 = vsel %vm705, %v700, %v629
        %v718 = vsel %vm705, %v701, %v631
        %v719 = vsel %vm705, %v702, %v633
        %v720 = vsel %vm705, %v703, %v635
        %v721 = vsel %vm705, %v704, %v637
        %v722 = vpack.c.bf16 %v707, %v706
        %v723 = vpack.c.bf16 %v709, %v708
        %v724 = vpack.c.bf16 %v711, %v710
        %v725 = vpack.c.bf16 %v713, %v712
        %v726 = vpack.c.bf16 %v715, %v714
        %v727 = vpack.c.bf16 %v717, %v716
        %v728 = vpack.c.bf16 %v719, %v718
        %v729 = vpack.c.bf16 %v721, %v720
        %v730 = vld [vmem:[%s2] sm:$0xff]
        %v731 = vld [vmem:[%s2 + $0x8] sm:$0xff]
        %v732 = vld [vmem:[%s2 + $0x10] sm:$0xff]
        %v733 = vld [vmem:[%s2 + $0x18] sm:$0xff]
        %v734 = vld [vmem:[%s2 + $0x20] sm:$0xff]
        %v735 = vld [vmem:[%s2 + $0x28] sm:$0xff]
        %v736 = vld [vmem:[%s2 + $0x30] sm:$0xff]
        %v737 = vld [vmem:[%s2 + $0x38] sm:$0xff]
        %v738 = vld [vmem:[%s2 + $0x40] sm:$0xff]
        %v739 = vld [vmem:[%s2 + $0x48] sm:$0xff]
        %v750 = vunpack.c.l.b16 %v730
        %v751 = vunpack.c.h.b16 %v730
        %v752 = vunpack.c.l.b16 %v731
        %v753 = vunpack.c.h.b16 %v731
        %v754 = vunpack.c.l.b16 %v732
        %v755 = vunpack.c.h.b16 %v732
        %v756 = vunpack.c.l.b16 %v733
        %v757 = vunpack.c.h.b16 %v733
        %v758 = vunpack.c.l.b16 %v734
        %v759 = vunpack.c.h.b16 %v734
        %v760 = vunpack.c.l.b16 %v735
        %v761 = vunpack.c.h.b16 %v735
        %v762 = vunpack.c.l.b16 %v736
        %v763 = vunpack.c.h.b16 %v736
        %v764 = vunpack.c.l.b16 %v737
        %v765 = vunpack.c.h.b16 %v737
        %v766 = vunpack.c.l.b16 %v738
        %v767 = vunpack.c.h.b16 %v738
        %v768 = vunpack.c.l.b16 %v739
        %v769 = vunpack.c.h.b16 %v739
        %v770 = vpack.c.b16 %v752, %v750
        %v771 = vpack.c.b16 %v753, %v751
        %v772 = vpack.c.b16 %v756, %v754
        %v773 = vpack.c.b16 %v757, %v755
        %v774 = vpack.c.b16 %v760, %v758
        %v775 = vpack.c.b16 %v761, %v759
        %v776 = vpack.c.b16 %v764, %v762
        %v777 = vpack.c.b16 %v765, %v763
        %v778 = vpack.c.b16 %v768, %v766
        %v779 = vpack.c.b16 %v769, %v767
        %vm790 = vcmask 654336
        %v792 = vsel %vm790, %v722, 0
        %v795 = vsel %vm790, %v723, 0
        %v798 = vsel %vm790, %v724, 0
        %v801 = vsel %vm790, %v725, 0
        %v804 = vsel %vm790, %v726, 0
        %v807 = vsel %vm790, %v727, 0
        %v810 = vsel %vm790, %v728, 0
        %v813 = vsel %vm790, %v729, 0
        %815 = vmatpush.bf16.msra.mxu0 0
        %816 = vmatpush.bf16.msra.mxu0 0
        %817 = vmatpush.bf16.msra.mxu0 0
        %818 = vmatpush.bf16.msra.mxu0 %v778
        %819 = vmatpush.bf16.msra.mxu0 %v776
        %820 = vmatpush.bf16.msra.mxu0 %v774
        %821 = vmatpush.bf16.msra.mxu0 %v772
        %822 = vmatpush.bf16.msra.mxu0 %v770
        %823 = vmatmul.bf16.gmra.mxu0 %v792
        %v824 = vpop.f32.mrf.mxu0
        %v825 = vadd.f32 0.0, %v824
        %v826 = vpop.f32.mrf.mxu0
        %v827 = vadd.f32 0.0, %v826
        %828 = vmatmul.bf16.gmra.mxu0 %v795
        %v829 = vpop.f32.mrf.mxu0
        %v830 = vadd.f32 0.0, %v829
        %v831 = vpop.f32.mrf.mxu0
        %v832 = vadd.f32 0.0, %v831
        %833 = vmatmul.bf16.gmra.mxu0 %v798
        %v834 = vpop.f32.mrf.mxu0
        %v835 = vadd.f32 0.0, %v834
        %v836 = vpop.f32.mrf.mxu0
        %v837 = vadd.f32 0.0, %v836
        %838 = vmatmul.bf16.gmra.mxu0 %v801
        %v839 = vpop.f32.mrf.mxu0
        %v840 = vadd.f32 0.0, %v839
        %v841 = vpop.f32.mrf.mxu0
        %v842 = vadd.f32 0.0, %v841
        %843 = vmatmul.bf16.gmra.mxu0 %v804
        %v844 = vpop.f32.mrf.mxu0
        %v845 = vadd.f32 0.0, %v844
        %v846 = vpop.f32.mrf.mxu0
        %v847 = vadd.f32 0.0, %v846
        %848 = vmatmul.bf16.gmra.mxu0 %v807
        %v849 = vpop.f32.mrf.mxu0
        %v850 = vadd.f32 0.0, %v849
        %v851 = vpop.f32.mrf.mxu0
        %v852 = vadd.f32 0.0, %v851
        %853 = vmatmul.bf16.gmra.mxu0 %v810
        %v854 = vpop.f32.mrf.mxu0
        %v855 = vadd.f32 0.0, %v854
        %v856 = vpop.f32.mrf.mxu0
        %v857 = vadd.f32 0.0, %v856
        %858 = vmatmul.bf16.gmra.mxu0 %v813
        %v859 = vpop.f32.mrf.mxu0
        %v860 = vadd.f32 0.0, %v859
        %v861 = vpop.f32.mrf.mxu0
        %v862 = vadd.f32 0.0, %v861
        %863 = vdwg.mxu0
        %864 = vmatpush.bf16.msra.mxu0 0
        %865 = vmatpush.bf16.msra.mxu0 0
        %866 = vmatpush.bf16.msra.mxu0 0
        %867 = vmatpush.bf16.msra.mxu0 %v779
        %868 = vmatpush.bf16.msra.mxu0 %v777
        %869 = vmatpush.bf16.msra.mxu0 %v775
        %870 = vmatpush.bf16.msra.mxu0 %v773
        %871 = vmatpush.bf16.msra.mxu0 %v771
        %872 = vmatmul.bf16.gmra.mxu0 %v792
        %v873 = vpop.f32.mrf.mxu0
        %v874 = vadd.f32 0.0, %v873
        %v875 = vpop.f32.mrf.mxu0
        %v876 = vadd.f32 0.0, %v875
        %877 = vmatmul.bf16.gmra.mxu0 %v795
        %v878 = vpop.f32.mrf.mxu0
        %v879 = vadd.f32 0.0, %v878
        %v880 = vpop.f32.mrf.mxu0
        %v881 = vadd.f32 0.0, %v880
        %882 = vmatmul.bf16.gmra.mxu0 %v798
        %v883 = vpop.f32.mrf.mxu0
        %v884 = vadd.f32 0.0, %v883
        %v885 = vpop.f32.mrf.mxu0
        %v886 = vadd.f32 0.0, %v885
        %887 = vmatmul.bf16.gmra.mxu0 %v801
        %v888 = vpop.f32.mrf.mxu0
        %v889 = vadd.f32 0.0, %v888
        %v890 = vpop.f32.mrf.mxu0
        %v891 = vadd.f32 0.0, %v890
        %892 = vmatmul.bf16.gmra.mxu0 %v804
        %v893 = vpop.f32.mrf.mxu0
        %v894 = vadd.f32 0.0, %v893
        %v895 = vpop.f32.mrf.mxu0
        %v896 = vadd.f32 0.0, %v895
        %897 = vmatmul.bf16.gmra.mxu0 %v807
        %v898 = vpop.f32.mrf.mxu0
        %v899 = vadd.f32 0.0, %v898
        %v900 = vpop.f32.mrf.mxu0
        %v901 = vadd.f32 0.0, %v900
        %902 = vmatmul.bf16.gmra.mxu0 %v810
        %v903 = vpop.f32.mrf.mxu0
        %v904 = vadd.f32 0.0, %v903
        %v905 = vpop.f32.mrf.mxu0
        %v906 = vadd.f32 0.0, %v905
        %907 = vmatmul.bf16.gmra.mxu0 %v813
        %v908 = vpop.f32.mrf.mxu0
        %v909 = vadd.f32 0.0, %v908
        %v910 = vpop.f32.mrf.mxu0
        %v911 = vadd.f32 0.0, %v910
        %912 = vdwg.mxu0
        %v913 = vmul.f32 %v825, %v825
        %v914 = vmul.f32 %v827, %v827
        %v915 = vmul.f32 %v830, %v830
        %v916 = vmul.f32 %v832, %v832
        %v917 = vmul.f32 %v835, %v835
        %v918 = vmul.f32 %v837, %v837
        %v919 = vmul.f32 %v840, %v840
        %v920 = vmul.f32 %v842, %v842
        %v921 = vmul.f32 %v845, %v845
        %v922 = vmul.f32 %v847, %v847
        %v923 = vmul.f32 %v850, %v850
        %v924 = vmul.f32 %v852, %v852
        %v925 = vmul.f32 %v855, %v855
        %v926 = vmul.f32 %v857, %v857
        %v927 = vmul.f32 %v860, %v860
        %v928 = vmul.f32 %v862, %v862
        %v929 = vmul.f32 %v874, %v874
        %v930 = vmul.f32 %v876, %v876
        %v931 = vmul.f32 %v879, %v879
        %v932 = vmul.f32 %v881, %v881
        %v933 = vmul.f32 %v884, %v884
        %v934 = vmul.f32 %v886, %v886
        %v935 = vmul.f32 %v889, %v889
        %v936 = vmul.f32 %v891, %v891
        %v937 = vmul.f32 %v894, %v894
        %v938 = vmul.f32 %v896, %v896
        %v939 = vmul.f32 %v899, %v899
        %v940 = vmul.f32 %v901, %v901
        %v941 = vmul.f32 %v904, %v904
        %v942 = vmul.f32 %v906, %v906
        %v943 = vmul.f32 %v909, %v909
        %v944 = vmul.f32 %v911, %v911
        %v945 = vadd.f32 %v913, %v929
        %v946 = vadd.f32 %v914, %v930
        %v947 = vadd.f32 %v915, %v931
        %v948 = vadd.f32 %v916, %v932
        %v949 = vadd.f32 %v917, %v933
        %v950 = vadd.f32 %v918, %v934
        %v951 = vadd.f32 %v919, %v935
        %v952 = vadd.f32 %v920, %v936
        %v953 = vadd.f32 %v921, %v937
        %v954 = vadd.f32 %v922, %v938
        %v955 = vadd.f32 %v923, %v939
        %v956 = vadd.f32 %v924, %v940
        %v957 = vadd.f32 %v925, %v941
        %v958 = vadd.f32 %v926, %v942
        %v959 = vadd.f32 %v927, %v943
        %v960 = vadd.f32 %v928, %v944
        %v961 = vrsqrt.pop %v945
        %v962 = vmul.f32 %v961, %v945
        %v963 = vmul.f32 %v962, %v961
        %v964 = vmul.f32 0.5, %v963
        %v965 = vsub.f32 1.5, %v964
        %v966 = vmul.f32 %v961, %v965
        %v967 = vmul.f32 %v945, %v966
        %vm968 = vcmp.eq.f32.partialorder %v945, inf
        %v969 = vsel %vm968, %v945, %v967
        %vm970 = vcmp.eq.f32.partialorder %v945, 0.0
        %v971 = vand.u32 %v945, 2147483648
        %v972 = vsel %vm970, %v971, %v969
        %v973 = vrsqrt.pop %v946
        %v974 = vmul.f32 %v973, %v946
        %v975 = vmul.f32 %v974, %v973
        %v976 = vmul.f32 0.5, %v975
        %v977 = vsub.f32 1.5, %v976
        %v978 = vmul.f32 %v973, %v977
        %v979 = vmul.f32 %v946, %v978
        %vm980 = vcmp.eq.f32.partialorder %v946, inf
        %v981 = vsel %vm980, %v946, %v979
        %vm982 = vcmp.eq.f32.partialorder %v946, 0.0
        %v983 = vand.u32 %v946, 2147483648
        %v984 = vsel %vm982, %v983, %v981
        %v985 = vrsqrt.pop %v947
        %v986 = vmul.f32 %v985, %v947
        %v987 = vmul.f32 %v986, %v985
        %v988 = vmul.f32 0.5, %v987
        %v989 = vsub.f32 1.5, %v988
        %v990 = vmul.f32 %v985, %v989
        %v991 = vmul.f32 %v947, %v990
        %vm992 = vcmp.eq.f32.partialorder %v947, inf
        %v993 = vsel %vm992, %v947, %v991
        %vm994 = vcmp.eq.f32.partialorder %v947, 0.0
        %v995 = vand.u32 %v947, 2147483648
        %v996 = vsel %vm994, %v995, %v993
        %v997 = vrsqrt.pop %v948
        %v998 = vmul.f32 %v997, %v948
        %v999 = vmul.f32 %v998, %v997
        %v1000 = vmul.f32 0.5, %v999
        %v1001 = vsub.f32 1.5, %v1000
        %v1002 = vmul.f32 %v997, %v1001
        %v1003 = vmul.f32 %v948, %v1002
        %vm1004 = vcmp.eq.f32.partialorder %v948, inf
        %v1005 = vsel %vm1004, %v948, %v1003
        %vm1006 = vcmp.eq.f32.partialorder %v948, 0.0
        %v1007 = vand.u32 %v948, 2147483648
        %v1008 = vsel %vm1006, %v1007, %v1005
        %v1009 = vrsqrt.pop %v949
        %v1010 = vmul.f32 %v1009, %v949
        %v1011 = vmul.f32 %v1010, %v1009
        %v1012 = vmul.f32 0.5, %v1011
        %v1013 = vsub.f32 1.5, %v1012
        %v1014 = vmul.f32 %v1009, %v1013
        %v1015 = vmul.f32 %v949, %v1014
        %vm1016 = vcmp.eq.f32.partialorder %v949, inf
        %v1017 = vsel %vm1016, %v949, %v1015
        %vm1018 = vcmp.eq.f32.partialorder %v949, 0.0
        %v1019 = vand.u32 %v949, 2147483648
        %v1020 = vsel %vm1018, %v1019, %v1017
        %v1021 = vrsqrt.pop %v950
        %v1022 = vmul.f32 %v1021, %v950
        %v1023 = vmul.f32 %v1022, %v1021
        %v1024 = vmul.f32 0.5, %v1023
        %v1025 = vsub.f32 1.5, %v1024
        %v1026 = vmul.f32 %v1021, %v1025
        %v1027 = vmul.f32 %v950, %v1026
        %vm1028 = vcmp.eq.f32.partialorder %v950, inf
        %v1029 = vsel %vm1028, %v950, %v1027
        %vm1030 = vcmp.eq.f32.partialorder %v950, 0.0
        %v1031 = vand.u32 %v950, 2147483648
        %v1032 = vsel %vm1030, %v1031, %v1029
        %v1033 = vrsqrt.pop %v951
        %v1034 = vmul.f32 %v1033, %v951
        %v1035 = vmul.f32 %v1034, %v1033
        %v1036 = vmul.f32 0.5, %v1035
        %v1037 = vsub.f32 1.5, %v1036
        %v1038 = vmul.f32 %v1033, %v1037
        %v1039 = vmul.f32 %v951, %v1038
        %vm1040 = vcmp.eq.f32.partialorder %v951, inf
        %v1041 = vsel %vm1040, %v951, %v1039
        %vm1042 = vcmp.eq.f32.partialorder %v951, 0.0
        %v1043 = vand.u32 %v951, 2147483648
        %v1044 = vsel %vm1042, %v1043, %v1041
        %v1045 = vrsqrt.pop %v952
        %v1046 = vmul.f32 %v1045, %v952
        %v1047 = vmul.f32 %v1046, %v1045
        %v1048 = vmul.f32 0.5, %v1047
        %v1049 = vsub.f32 1.5, %v1048
        %v1050 = vmul.f32 %v1045, %v1049
        %v1051 = vmul.f32 %v952, %v1050
        %vm1052 = vcmp.eq.f32.partialorder %v952, inf
        %v1053 = vsel %vm1052, %v952, %v1051
        %vm1054 = vcmp.eq.f32.partialorder %v952, 0.0
        %v1055 = vand.u32 %v952, 2147483648
        %v1056 = vsel %vm1054, %v1055, %v1053
        %v1057 = vrsqrt.pop %v953
        %v1058 = vmul.f32 %v1057, %v953
        %v1059 = vmul.f32 %v1058, %v1057
        %v1060 = vmul.f32 0.5, %v1059
        %v1061 = vsub.f32 1.5, %v1060
        %v1062 = vmul.f32 %v1057, %v1061
        %v1063 = vmul.f32 %v953, %v1062
        %vm1064 = vcmp.eq.f32.partialorder %v953, inf
        %v1065 = vsel %vm1064, %v953, %v1063
        %vm1066 = vcmp.eq.f32.partialorder %v953, 0.0
        %v1067 = vand.u32 %v953, 2147483648
        %v1068 = vsel %vm1066, %v1067, %v1065
        %v1069 = vrsqrt.pop %v954
        %v1070 = vmul.f32 %v1069, %v954
        %v1071 = vmul.f32 %v1070, %v1069
        %v1072 = vmul.f32 0.5, %v1071
        %v1073 = vsub.f32 1.5, %v1072
        %v1074 = vmul.f32 %v1069, %v1073
        %v1075 = vmul.f32 %v954, %v1074
        %vm1076 = vcmp.eq.f32.partialorder %v954, inf
        %v1077 = vsel %vm1076, %v954, %v1075
        %vm1078 = vcmp.eq.f32.partialorder %v954, 0.0
        %v1079 = vand.u32 %v954, 2147483648
        %v1080 = vsel %vm1078, %v1079, %v1077
        %v1081 = vrsqrt.pop %v955
        %v1082 = vmul.f32 %v1081, %v955
        %v1083 = vmul.f32 %v1082, %v1081
        %v1084 = vmul.f32 0.5, %v1083
        %v1085 = vsub.f32 1.5, %v1084
        %v1086 = vmul.f32 %v1081, %v1085
        %v1087 = vmul.f32 %v955, %v1086
        %vm1088 = vcmp.eq.f32.partialorder %v955, inf
        %v1089 = vsel %vm1088, %v955, %v1087
        %vm1090 = vcmp.eq.f32.partialorder %v955, 0.0
        %v1091 = vand.u32 %v955, 2147483648
        %v1092 = vsel %vm1090, %v1091, %v1089
        %v1093 = vrsqrt.pop %v956
        %v1094 = vmul.f32 %v1093, %v956
        %v1095 = vmul.f32 %v1094, %v1093
        %v1096 = vmul.f32 0.5, %v1095
        %v1097 = vsub.f32 1.5, %v1096
        %v1098 = vmul.f32 %v1093, %v1097
        %v1099 = vmul.f32 %v956, %v1098
        %vm1100 = vcmp.eq.f32.partialorder %v956, inf
        %v1101 = vsel %vm1100, %v956, %v1099
        %vm1102 = vcmp.eq.f32.partialorder %v956, 0.0
        %v1103 = vand.u32 %v956, 2147483648
        %v1104 = vsel %vm1102, %v1103, %v1101
        %v1105 = vrsqrt.pop %v957
        %v1106 = vmul.f32 %v1105, %v957
        %v1107 = vmul.f32 %v1106, %v1105
        %v1108 = vmul.f32 0.5, %v1107
        %v1109 = vsub.f32 1.5, %v1108
        %v1110 = vmul.f32 %v1105, %v1109
        %v1111 = vmul.f32 %v957, %v1110
        %vm1112 = vcmp.eq.f32.partialorder %v957, inf
        %v1113 = vsel %vm1112, %v957, %v1111
        %vm1114 = vcmp.eq.f32.partialorder %v957, 0.0
        %v1115 = vand.u32 %v957, 2147483648
        %v1116 = vsel %vm1114, %v1115, %v1113
        %v1117 = vrsqrt.pop %v958
        %v1118 = vmul.f32 %v1117, %v958
        %v1119 = vmul.f32 %v1118, %v1117
        %v1120 = vmul.f32 0.5, %v1119
        %v1121 = vsub.f32 1.5, %v1120
        %v1122 = vmul.f32 %v1117, %v1121
        %v1123 = vmul.f32 %v958, %v1122
        %vm1124 = vcmp.eq.f32.partialorder %v958, inf
        %v1125 = vsel %vm1124, %v958, %v1123
        %vm1126 = vcmp.eq.f32.partialorder %v958, 0.0
        %v1127 = vand.u32 %v958, 2147483648
        %v1128 = vsel %vm1126, %v1127, %v1125
        %v1129 = vrsqrt.pop %v959
        %v1130 = vmul.f32 %v1129, %v959
        %v1131 = vmul.f32 %v1130, %v1129
        %v1132 = vmul.f32 0.5, %v1131
        %v1133 = vsub.f32 1.5, %v1132
        %v1134 = vmul.f32 %v1129, %v1133
        %v1135 = vmul.f32 %v959, %v1134
        %vm1136 = vcmp.eq.f32.partialorder %v959, inf
        %v1137 = vsel %vm1136, %v959, %v1135
        %vm1138 = vcmp.eq.f32.partialorder %v959, 0.0
        %v1139 = vand.u32 %v959, 2147483648
        %v1140 = vsel %vm1138, %v1139, %v1137
        %v1141 = vrsqrt.pop %v960
        %v1142 = vmul.f32 %v1141, %v960
        %v1143 = vmul.f32 %v1142, %v1141
        %v1144 = vmul.f32 0.5, %v1143
        %v1145 = vsub.f32 1.5, %v1144
        %v1146 = vmul.f32 %v1141, %v1145
        %v1147 = vmul.f32 %v960, %v1146
        %vm1148 = vcmp.eq.f32.partialorder %v960, inf
        %v1149 = vsel %vm1148, %v960, %v1147
        %vm1150 = vcmp.eq.f32.partialorder %v960, 0.0
        %v1151 = vand.u32 %v960, 2147483648
        %v1152 = vsel %vm1150, %v1151, %v1149
        %v1153 = vld [vmem:[%s3] sm:$0xff]
        %v1154 = vld [vmem:[%s3 + $0x8] sm:$0xff]
        %1155 = vmatpush.xpose.msra.mxu0 %v1152
        %1156 = vmatpush.xpose.msra.mxu0 %v1140
        %1157 = vmatpush.xpose.msra.mxu0 %v1128
        %1158 = vmatpush.xpose.msra.mxu0 %v1116
        %1159 = vmatpush.xpose.msra.mxu0 %v1104
        %1160 = vmatpush.xpose.msra.mxu0 %v1092
        %1161 = vmatpush.xpose.msra.mxu0 %v1080
        %1162 = vmatpush.xpose.msra.mxu0 %v1068
        %1163 = vmatpush.xpose.msra.mxu0 %v1056
        %1164 = vmatpush.xpose.msra.mxu0 %v1044
        %1165 = vmatpush.xpose.msra.mxu0 %v1032
        %1166 = vmatpush.xpose.msra.mxu0 %v1020
        %1167 = vmatpush.xpose.msra.mxu0 %v1008
        %1168 = vmatpush.xpose.msra.mxu0 %v996
        %1169 = vmatpush.xpose.msra.mxu0 %v984
        %1170 = vmatpush.xpose.msra.mxu0 %v972
        %1171 = vmatmul.f32.gmra.mxu0 %v1153
        %v1172 = vpop.f32.mrf.mxu0
        %v1173 = vadd.f32 1e-05, %v1172
        %1174 = vmatmul.f32.gmra.mxu0 %v1154
        %v1175 = vpop.f32.mrf.mxu0
        %v1176 = vadd.f32 1e-05, %v1175
        %1177 = vdwg.mxu0
        %v1178 = vlog2.pop %v1173
        %v1179 = vmul.f32 %v1178, 0.6931472
        %v1180 = vlog2.pop %v1176
        %v1181 = vmul.f32 %v1180, 0.6931472
        %v1182 = vmul.f32 %v1179, 0.0868589
        %v1183 = vmul.f32 %v1181, 0.0868589
        %v1184 = vadd.f32 %v1182, 0.8
        %v1185 = vadd.f32 %v1183, 0.8
        %1186 = vst [vmem:[%s260] sm:$0xff] %v1184
        %1187 = vst [vmem:[%s260 + $0x8] sm:$0xff] %v1185
        %s1188 = sand.u32 %s142, 1
        %s1189 = scalar_lea.sflag [#allocation3], %s1188
        %s1190 = sand.u32 %s142, 1
        %s1191 = smul.addr %s1190, 16
        %s1192 = scalar_lea.vmem [#allocation2], %s1191
        // Predicated region
        $region37: #{tpu_custom_call.1} parent=35 // pred_check
          %p1193 = pneg %p152
        $region38: #{tpu_custom_call.1} parent=35 // pred_check_branch
          %1195 = sbr.rel (%p1193) target = $region40
        $region39: #{tpu_custom_call.1} parent=35 // pred_region
          %1197 = vsyncadd %s1189, 0
          %s1198 = smul.addr %s22, 4
          %s1199 = sadd.s32 %s23, %s1198
          %s1200 = smul.addr %s1199, 8
          %s1201 = scalar_lea.hbm %s4, %s1200
          %s1202 = sshll.u32 %s1192, 4
          %s1203 = int_to_ptr.vmem [resolvable:$true] %s1202
          %s1204 = sshll.u32 %s1201, 4
          %s1205 = int_to_ptr.hbm [resolvable:$true] %s1204
          %1210 = dma.vmem_to_hbm [thread:$0]  %s1203, 256, %s1205, %s1189, 128, 256, 8
        $region40: #{tpu_custom_call.1} parent=35 // pred_fallthru
          _
      $region36: #{tpu_custom_call.1} parent=5 // pred_fallthru
        _
      %p1211 = scmp.le.s32.totalorder 2, %s13
      // Predicated region
      $region41: #{tpu_custom_call.1} parent=5 // pred_check
        %p1212 = pneg %p1211
      $region42: #{tpu_custom_call.1} parent=5 // pred_check_branch
        %1214 = sbr.rel (%p1212) target = $region44
      $region43: #{tpu_custom_call.1} parent=5 // pred_region
        %s1215 = ssub.s32 %s13, 2
        // Predicated region
        $region45: #{tpu_custom_call.1} parent=43 // pred_check
          %p1216 = pneg %p158
        $region46: #{tpu_custom_call.1} parent=43 // pred_check_branch
          %1218 = sbr.rel (%p1216) target = $region48
        $region47: #{tpu_custom_call.1} parent=43 // pred_region
          %s1219 = sand.u32 %s143, 1
          %s1220 = scalar_lea.sflag [#allocation3], %s1219
          %s1221 = sand.u32 %s143, 1
          %s1222 = smul.addr %s1221, 16
          %s1223 = scalar_lea.vmem [#allocation2], %s1222
          %1225 = dma.done %s1220, 256
        $region48: #{tpu_custom_call.1} parent=43 // pred_fallthru
          _
      $region44: #{tpu_custom_call.1} parent=5 // pred_fallthru
        _
    $region6: #{tpu_custom_call.1} parent=1 // loop_footer
      %s17 = sadd.s32 1, %s13
    $region7: #{tpu_custom_call.1} parent=1 // loop_footer_branch
      %12 = sbr.rel target = $region3
    $region8: #{tpu_custom_call.1} parent=1 // loop_exit
      _
    %1226 = vsyncpa [#allocation3], 1
    %s1227 = scalar_lea.sflag [#allocation3], 1
    %1228 = vsyncpa %s1227, 1

</llo_original>
